<compile_context>
chip_gen: v5e
topology: v5e:2x2
jax: 0.10.0
libtpu: 0.0.40
codegen_flags: <defaults>
</compile_context>

<pallas_src>
import numpy as np
import jax
import jax.numpy as jnp
from jax.experimental import pallas as pl
from jax.experimental.pallas import tpu as pltpu


# ------------------------- linear-map glue (small) --------------------------

def adaptive_pool_matrix(in_size, out_size):
    """Row-stochastic matrix reproducing nn.AdaptiveAvgPool along one axis."""
    P = np.zeros((out_size, in_size), dtype=np.float32)
    for i in range(out_size):
        start = (i * in_size) // out_size
        end = -(-((i + 1) * in_size) // out_size)  # ceil
        P[i, start:end] = 1.0 / (end - start)
    return P


def bilinear_upsample_matrix(in_size, out_size):
    """Matrix reproducing F.interpolate(mode='bilinear', align_corners=False)
    along one axis (PyTorch source-index convention, negatives clamped to 0)."""
    U = np.zeros((out_size, in_size), dtype=np.float32)
    scale = in_size / out_size
    for y in range(out_size):
        src = (y + 0.5) * scale - 0.5
        if src < 0.0:
            src = 0.0
        x0 = min(int(np.floor(src)), in_size - 1)
        x1 = min(x0 + 1, in_size - 1)
        lam = src - x0
        U[y, x0] += 1.0 - lam
        U[y, x1] += lam
    return U


# ----------------------------- Pallas kernel -------------------------------

def _psp_bottleneck_kernel(x_ref, u_ref, z_ref, w_ref, o_ref, acc_ref):
    # x_ref:   (1, C, tc)   bf16  NCHW feats, one spatial-column tile of one image
    # u_ref:   (P1, tc)     bf16  fused bilinear-upsample rows (+ trailing ones row)
    # z_ref:   (1, Np, P1)  bf16  pooled stage outputs through the bottleneck
    #                             (+ trailing bias column)
    # w_ref:   (Np, C)      bf16  identity-branch slice of the bottleneck weight
    # o_ref:   (1, Np, tc)        relu(w @ x + z @ u)
    # acc_ref: (Np, tc)     f32   single accumulator (VMEM scratch)
    acc_ref[...] = jnp.dot(w_ref[...], x_ref[0],
                           preferred_element_type=jnp.float32)
    acc_ref[...] += jnp.dot(z_ref[0], u_ref[...],
                            preferred_element_type=jnp.float32)
    o_ref[0] = jnp.maximum(acc_ref[...], 0.0).astype(o_ref.dtype)


def _vmem_budget_and_limit():
    """Generation-aware VMEM sizing (v5e/v6e: 128 MiB, v7x: 64 MiB per TC)."""
    cap = 64 * 1024 * 1024  # conservative default = smallest (v7x per-TC) VMEM
    try:
        info = pltpu.get_tpu_info()
        cap = int(getattr(info, "vmem_capacity_bytes", cap))
    except Exception:
        pass
    return int(cap * 0.70), int(cap * 0.84)   # (tiling budget, vmem_limit_bytes)


def _pick_col_tile(hw, c, n_p, p1, vmem_budget_bytes):
    """Largest spatial-column tile (multiple of 128, 256-aligned when possible)
    that keeps double-buffered streamed blocks + double-buffered resident blocks
    + the f32 accumulator inside the budget."""
    if hw <= 128:
        return hw                                   # full-extent block is legal
    resident = 2 * 2 * n_p * (c + p1)               # w + z, bf16, double-buffered
    per_col = 4 * (c + p1) + 8 * n_p + 4 * n_p      # x,u (bf16, 2x) + out (f32, 2x) + acc
    t = max(vmem_budget_bytes - resident, 0) // max(per_col, 1)
    t = min(int(t), 2048, (hw // 128) * 128)
    t = max(128, (t // 128) * 128)
    if t >= 256:                                    # keep the MXU N-dim 256-aligned
        t = (t // 256) * 256
    return t


def _fused_bottleneck(feats3, u_ext, z_ext, w_id, *, col_tile, vmem_limit,
                      out_dtype):
    B, C, HW = feats3.shape
    P1 = u_ext.shape[0]
    Np = w_id.shape[0]
    tc = col_tile
    grid = (B, pl.cdiv(HW, tc))                     # partial last block is masked
    flops = 2 * B * HW * Np * (C + P1)
    bytes_accessed = int(B * C * HW * 2 + P1 * HW * 2 + B * Np * P1 * 2
                         + Np * C * 2
                         + B * Np * HW * jnp.dtype(out_dtype).itemsize)
    return pl.pallas_call(
        _psp_bottleneck_kernel,
        out_shape=jax.ShapeDtypeStruct((B, Np, HW), out_dtype),
        grid_spec=pltpu.PrefetchScalarGridSpec(
            num_scalar_prefetch=0,
            grid=grid,
            in_specs=[
                pl.BlockSpec((1, C, tc), lambda b, r: (b, 0, r)),
                pl.BlockSpec((P1, tc), lambda b, r: (0, r)),
                pl.BlockSpec((1, Np, P1), lambda b, r: (b, 0, 0)),
                pl.BlockSpec((Np, C), lambda b, r: (0, 0)),
            ],
            out_specs=pl.BlockSpec((1, Np, tc), lambda b, r: (b, 0, r)),
            scratch_shapes=[pltpu.VMEM((Np, tc), jnp.float32)],
        ),
        compiler_params=pltpu.CompilerParams(
            dimension_semantics=("parallel", "parallel"),
            vmem_limit_bytes=vmem_limit,
        ),
        cost_estimate=pl.CostEstimate(
            flops=flops, transcendentals=0, bytes_accessed=bytes_accessed),
    )(feats3, u_ext, z_ext, w_id)


# ------------------------------ PSP forward ---------------------------------

def psp_module(feats_nchw, stage_weights, w_bottleneck, b_bottleneck,
               sizes=(1, 2, 3, 6), out_dtype=jnp.float32):
    """Forward pass of PSPModule.

    feats_nchw:     (B, C, H, W) float32
    stage_weights:  list of (C, C) 1x1-conv weights (bias=False), one per size
    w_bottleneck:   (OutC, C*(len(sizes)+1)) 1x1-conv weight
    b_bottleneck:   (OutC,) bias
    returns:        (B, OutC, H, W) in `out_dtype` (NCHW, matching PyTorch)
    """
    B, C, H, W = feats_nchw.shape
    OutC = w_bottleneck.shape[0]
    HW = H * W
    P = int(sum(s * s for s in sizes))
    Np = ((OutC + 7) // 8) * 8          # sublane-aligned; lane dim is the spatial tile

    # Zero-pad output channels of weight / bias (padded rows produce relu(0)=0).
    w_b = w_bottleneck.astype(jnp.float32)
    b_b = b_bottleneck.astype(jnp.float32)
    if Np != OutC:
        w_b = jnp.concatenate(
            [w_b, jnp.zeros((Np - OutC, w_b.shape[1]), jnp.float32)], axis=0)
        b_b = jnp.concatenate([b_b, jnp.zeros((Np - OutC,), jnp.float32)])

    # NCHW end-to-end: (B,C,H,W)->(B,C,H*W) reshape is free; single bf16 cast pass.
    feats3 = feats_nchw.reshape(B, C, HW).astype(jnp.bfloat16)

    # Build the combined pooling matrix (all stages) and the per-stage upsample rows.
    pool_rows, ups_rows = [], []
    for size in sizes:
        ph = adaptive_pool_matrix(H, size)          # (s, H)
        pw = adaptive_pool_matrix(W, size)          # (s, W)
        uh = bilinear_upsample_matrix(size, H)      # (H, s)
        uw = bilinear_upsample_matrix(size, W)      # (W, s)
        pool_rows.append(np.kron(ph, pw))           # (s*s, H*W)
        ups_rows.append(np.kron(uh, uw).T)          # (s*s, H*W)
    pool_cat = jnp.asarray(np.concatenate(pool_rows, axis=0), jnp.bfloat16)

    # All pyramid poolings in ONE matmul over the bf16 feats copy (read once).
    pooled = jnp.einsum('bch,ph->bcp', feats3, pool_cat,
                        preferred_element_type=jnp.float32)          # (B, C, P)

    # Fold each stage 1x1 conv into its slice of the bottleneck weight and push
    # the tiny pooled grids through it -> priors are already bottlenecked.
    z_blocks, off = [], 0
    for idx, (size, wc) in enumerate(zip(sizes, stage_weights)):
        ss = size * size
        m_s = w_b[:, idx * C:(idx + 1) * C] @ wc.astype(jnp.float32)  # (Np, C)
        z_blocks.append(
            jnp.einsum('oc,bcp->bop', m_s, pooled[:, :, off:off + ss]))
        off += ss
    z_cat = jnp.concatenate(z_blocks, axis=2)                         # (B, Np, P)

    # Fold the bias: ones row appended to the upsample matrix, bias column to z.
    z_ext = jnp.concatenate(
        [z_cat, jnp.broadcast_to(b_b.reshape(1, Np, 1), (B, Np, 1))],
        axis=2).astype(jnp.bfloat16)                                  # (B, Np, P+1)
    u_np = np.concatenate(ups_rows + [np.ones((1, HW), np.float32)], axis=0)
    u_ext = jnp.asarray(u_np, jnp.bfloat16)                           # (P+1, HW)

    # Identity branch: feats is LAST in the torch.cat channel order.
    w_id = w_b[:, len(sizes) * C:].astype(jnp.bfloat16)               # (Np, C)

    budget, limit = _vmem_budget_and_limit()
    tc = _pick_col_tile(HW, C, Np, P + 1, budget)
    y = _fused_bottleneck(feats3, u_ext, z_ext, w_id,
                          col_tile=tc, vmem_limit=limit,
                          out_dtype=out_dtype)                        # (B, Np, HW)
    if Np != OutC:
        y = y[:, :OutC, :]
    return y.reshape(B, OutC, H, W)


# ------------------- pure-JAX reference (unfused, f32) ----------------------

def psp_reference(feats_nchw, stage_weights, w_bottleneck, b_bottleneck,
                  sizes=(1, 2, 3, 6)):
    B, C, H, W = feats_nchw.shape
    feats = jnp.transpose(feats_nchw, (0, 2, 3, 1)).astype(jnp.float32)
    priors = []
    for size, wc in zip(sizes, stage_weights):
        ph = jnp.asarray(adaptive_pool_matrix(H, size))
        pw = jnp.asarray(adaptive_pool_matrix(W, size))
        uh = jnp.asarray(bilinear_upsample_matrix(size, H))
        uw = jnp.asarray(bilinear_upsample_matrix(size, W))
        pooled = jnp.einsum('iy,jx,byxc->bijc', ph, pw, feats)
        staged = jnp.einsum('bijc,oc->bijo', pooled, wc.astype(jnp.float32))
        priors.append(jnp.einsum('yi,xj,bijo->byxo', uh, uw, staged))
    priors.append(feats)
    x = jnp.concatenate(priors, axis=-1)
    y = jnp.einsum('byxk,ok->byxo', x, w_bottleneck.astype(jnp.float32))
    y = jnp.maximum(y + b_bottleneck.astype(jnp.float32), 0.0)
    return jnp.transpose(y, (0, 3, 1, 2))


def _run_case(key, B, C, H, W, out_features, sizes=(1, 2, 3, 6), tol=3e-2):
    k_feats, k_stage, k_wb, k_bb = jax.random.split(key, 4)
    feats = jax.random.normal(k_feats, (B, C, H, W), dtype=jnp.float32)
    stage_weights = [
        0.1 * jax.random.normal(jax.random.fold_in(k_stage, i), (C, C),
                                dtype=jnp.float32)
        for i in range(len(sizes))
    ]
    w_bottleneck = 0.1 * jax.random.normal(
        k_wb, (out_features, C * (len(sizes) + 1)), dtype=jnp.float32)
    b_bottleneck = 0.1 * jax.random.normal(
        k_bb, (out_features,), dtype=jnp.float32)

    out = psp_module(feats, stage_weights, w_bottleneck, b_bottleneck,
                     sizes=sizes)
    out = jax.block_until_ready(out)
    assert out.shape == (B, out_features, H, W)
    assert bool(jnp.all(out >= 0.0))  # ReLU sanity

    ref = jax.block_until_ready(
        psp_reference(feats, stage_weights, w_bottleneck, b_bottleneck, sizes))
    max_err = float(jnp.max(jnp.abs(out.astype(jnp.float32) - ref)))
    assert max_err < tol, f"mismatch vs reference: {max_err}"


# --------------------------------- main --------------------------------------

if __name__ == "__main__":
    key = jax.random.PRNGKey(0)
    k0, k1 = jax.random.split(key)
    # Primary small case (matches module defaults in miniature).
    _run_case(k0, B=2, C=4, H=16, W=16, out_features=32)
    # Secondary case: non-divisible H*W (partial masked block via cdiv grid) and
    # OutC not a multiple of 8 (channel padding + slice path).
    _run_case(k1, B=1, C=8, H=20, W=23, out_features=20)
    print("KERNEL_OK")
</pallas_src>

<mosaic_0001>
module attributes {stable_mosaic.version = 11 : i64} {
  func.func @_psp_bottleneck_kernel(%arg0: i32, %arg1: i32, %arg2: memref<1x4x256xbf16, #tpu.memory_space<vmem>>, %arg3: memref<51x256xbf16, #tpu.memory_space<vmem>>, %arg4: memref<1x32x51xbf16, #tpu.memory_space<vmem>>, %arg5: memref<32x4xbf16, #tpu.memory_space<vmem>>, %arg6: memref<1x32x256xf32, #tpu.memory_space<vmem>>, %arg7: memref<32x256xf32, #tpu.memory_space<vmem>>) attributes {dimension_semantics = [#tpu.dimension_semantics<parallel>, #tpu.dimension_semantics<parallel>], iteration_bounds = array<i64: 2, 1>, scalar_prefetch = 0 : i64, scratch_operands = 1 : i64, tpu.core_type = #tpu.core_type<tc>, window_params = [{transform_indices = @transform_0, window_bounds = array<i64: 1, 4, 256>}, {transform_indices = @transform_1, window_bounds = array<i64: 51, 256>}, {transform_indices = @transform_2, window_bounds = array<i64: 1, 32, 51>}, {pipeline_mode = #tpu.pipeline_mode<synchronous>, transform_indices = @transform_3, window_bounds = array<i64: 32, 4>}, {transform_indices = @transform_4, window_bounds = array<i64: 1, 32, 256>}]} {
    %c0 = arith.constant 0 : index
    %c0_0 = arith.constant 0 : index
    %0 = vector.load %arg5[%c0, %c0_0] : memref<32x4xbf16, #tpu.memory_space<vmem>>, vector<32x4xbf16>
    %c0_1 = arith.constant 0 : index
    %c0_2 = arith.constant 0 : index
    %c0_3 = arith.constant 0 : index
    %1 = vector.load %arg2[%c0_1, %c0_2, %c0_3] : memref<1x4x256xbf16, #tpu.memory_space<vmem>>, vector<1x4x256xbf16>
    %2 = vector.shape_cast %1 : vector<1x4x256xbf16> to vector<4x256xbf16>
    %cst = arith.constant dense<0.000000e+00> : vector<32x256xf32>
    %3 = tpu.matmul %0, %2, %cst {dimension_numbers = #tpu.dot_dimension_numbers<[1], [0], [0], [1], [0, 0, 1, 1], [], []>} : vector<32x4xbf16>, vector<4x256xbf16>, vector<32x256xf32> -> vector<32x256xf32>
    %c0_4 = arith.constant 0 : index
    %c0_5 = arith.constant 0 : index
    %4 = vector.load %arg7[%c0_4, %c0_5] : memref<32x256xf32, #tpu.memory_space<vmem>>, vector<32x256xf32>
    tpu.vector_store %arg7[%c0_4, %c0_5], %3 {strides = array<i32>} : memref<32x256xf32, #tpu.memory_space<vmem>>, vector<32x256xf32>,
    %c0_6 = arith.constant 0 : index
    %c0_7 = arith.constant 0 : index
    %5 = vector.load %arg7[%c0_6, %c0_7] : memref<32x256xf32, #tpu.memory_space<vmem>>, vector<32x256xf32>
    %c0_8 = arith.constant 0 : index
    %c0_9 = arith.constant 0 : index
    %c0_10 = arith.constant 0 : index
    %6 = vector.load %arg4[%c0_8, %c0_9, %c0_10] : memref<1x32x51xbf16, #tpu.memory_space<vmem>>, vector<1x32x51xbf16>
    %7 = vector.shape_cast %6 : vector<1x32x51xbf16> to vector<32x51xbf16>
    %c0_11 = arith.constant 0 : index
    %c0_12 = arith.constant 0 : index
    %8 = vector.load %arg3[%c0_11, %c0_12] : memref<51x256xbf16, #tpu.memory_space<vmem>>, vector<51x256xbf16>
    %cst_13 = arith.constant dense<0.000000e+00> : vector<32x256xf32>
    %9 = tpu.matmul %7, %8, %cst_13 {dimension_numbers = #tpu.dot_dimension_numbers<[1], [0], [0], [1], [0, 0, 1, 1], [], []>} : vector<32x51xbf16>, vector<51x256xbf16>, vector<32x256xf32> -> vector<32x256xf32>
    %10 = arith.addf %5, %9 : vector<32x256xf32>
    %c0_14 = arith.constant 0 : index
    %c0_15 = arith.constant 0 : index
    %11 = vector.load %arg7[%c0_14, %c0_15] : memref<32x256xf32, #tpu.memory_space<vmem>>, vector<32x256xf32>
    tpu.vector_store %arg7[%c0_14, %c0_15], %10 {strides = array<i32>} : memref<32x256xf32, #tpu.memory_space<vmem>>, vector<32x256xf32>,
    %c0_16 = arith.constant 0 : index
    %c0_17 = arith.constant 0 : index
    %12 = vector.load %arg7[%c0_16, %c0_17] : memref<32x256xf32, #tpu.memory_space<vmem>>, vector<32x256xf32>
    %cst_18 = arith.constant 0.000000e+00 : f32
    %13 = vector.broadcast %cst_18 : f32 to vector<32x256xf32>
    %14 = arith.maximumf %12, %13 : vector<32x256xf32>
    %c0_19 = arith.constant 0 : index
    %c0_20 = arith.constant 0 : index
    %c0_21 = arith.constant 0 : index
    %15 = vector.load %arg6[%c0_19, %c0_20, %c0_21] : memref<1x32x256xf32, #tpu.memory_space<vmem>>, vector<1x32x256xf32>
    %16 = vector.shape_cast %15 : vector<1x32x256xf32> to vector<32x256xf32>
    %17 = vector.shape_cast %14 : vector<32x256xf32> to vector<1x32x256xf32>
    tpu.vector_store %arg6[%c0_19, %c0_20, %c0_21], %17 {strides = array<i32>} : memref<1x32x256xf32, #tpu.memory_space<vmem>>, vector<1x32x256xf32>,
    return
  }
  func.func @transform_0(%arg0: i32, %arg1: i32) -> (i32, i32, i32) {
    %c0_i32 = arith.constant 0 : i32
    %c0_i32_0 = arith.constant 0 : i32
    return %arg0, %c0_i32, %arg1 : i32, i32, i32
  }
  func.func @transform_1(%arg0: i32, %arg1: i32) -> (i32, i32) {
    %c0_i32 = arith.constant 0 : i32
    %c0_i32_0 = arith.constant 0 : i32
    return %c0_i32, %arg1 : i32, i32
  }
  func.func @transform_2(%arg0: i32, %arg1: i32) -> (i32, i32, i32) {
    %c0_i32 = arith.constant 0 : i32
    %c0_i32_0 = arith.constant 0 : i32
    %c0_i32_1 = arith.constant 0 : i32
    return %arg0, %c0_i32, %c0_i32_0 : i32, i32, i32
  }
  func.func @transform_3(%arg0: i32, %arg1: i32) -> (i32, i32) {
    %c0_i32 = arith.constant 0 : i32
    %c0_i32_0 = arith.constant 0 : i32
    %c0_i32_1 = arith.constant 0 : i32
    return %c0_i32, %c0_i32_0 : i32, i32
  }
  func.func @transform_4(%arg0: i32, %arg1: i32) -> (i32, i32, i32) {
    %c0_i32 = arith.constant 0 : i32
    %c0_i32_0 = arith.constant 0 : i32
    return %arg0, %c0_i32, %arg1 : i32, i32, i32
  }
}

</mosaic_0001>

<llo_original>
// kernel: tpu_custom_call.1
$region0: #{tpu_custom_call.1}
  #allocation0 [shape = 'u32[]', space=smem, size = 0x4, offset = 0x4, fixed_abs, tag = 'smem constant byte address 0x4 - core index']
  #allocation1 [shape = 'u32[72,128]{1,0:T(1,128)}', space=vmem, size = 0x9000, scoped, tag = 'internal scratch']
  #allocation2 [shape = 'f32[32,256]{1,0:T(8,128)}', space=vmem, size = 0x8000, scoped, tag = 'scratch operand']
  %s0 = inlined_call_operand.vmem [shape: bf16[2,4,256], index: 0, kind: input, shape index: {}]
  %s1 = inlined_call_operand.hbm [shape: bf16[51,256], index: 1, kind: input, shape index: {}]
  %s2 = inlined_call_operand.hbm [shape: bf16[2,32,51], index: 2, kind: input, shape index: {}]
  %s3 = inlined_call_operand.vmem [shape: bf16[32,4], index: 3, kind: input, shape index: {}]
  %s4 = inlined_call_operand.hbm [shape: f32[2,32,256], index: 4, kind: output, shape index: {}]
  %s5 = sld [smem:[#allocation0]]
  $region57: #{tpu_custom_call.1} parent=0
    _
  %s7 = ssub.s32 1, %s5
  %s8 = scalar_select 0, %s7, %s5
  $region1: #{tpu_custom_call.1} parent=0
    #allocation3 [shape = 'u8[28672]{0}', space=vmem, size = 0x7000, scoped, tag = 'input window, operand 1, single buffered']
    #allocation4 [shape = 's32[2]{0}', space=sflag, size = 0x8, scoped, tag = 'scoped memory for tpu_custom_call.1']
    #allocation5 [shape = 's32[2]{0}', space=sflag, size = 0x8, scoped, tag = 'scoped memory for tpu_custom_call.1']
    #allocation6 [shape = 'u8[16384]{0}', space=vmem, size = 0x4000, scoped, tag = 'input window, operand 2']
    #allocation7 [shape = 's32[2]{0}', space=sflag, size = 0x8, scoped, tag = 'scoped memory for tpu_custom_call.1']
    #allocation8 [shape = 'u8[65536]{0}', space=vmem, size = 0x10000, scoped, tag = 'output window, operand 0']
    %9 = vsyncpa [#allocation4], 0
    %10 = vsyncpa [#allocation7], 0
    %s11 = scalar_lea.sflag [#allocation7], 1
    %12 = vsyncpa %s11, 0
    %13 = vsyncpa [#allocation5], 0
    %s14 = scalar_lea.sflag [#allocation5], 1
    %15 = vsyncpa %s14, 0
    loop: start=0, step=1, limit=4
    $region2: #{tpu_custom_call.1} parent=1 // loop_pre_header
      _
    $region3: #{tpu_custom_call.1} parent=1 // loop_header
      %s17 = sphi 0, %s21
      %p18 = scmp.ge.s32.totalorder %s17, 4
      %s24 = sphi 0, %s36
      %s25 = sphi 0, %s32
      %s26 = sphi 0, %s24
      %s27 = sphi 0, %s25
      %s28 = sphi 0, %s26
      %s29 = sphi 0, %s27
      %s41 = sphi 0, %s43
      %s44 = sphi 0, %s41
      %s45 = sphi 0, %s44
      %s61 = sphi 0, %s45
      %s67 = sphi 0, %s69
      %s70 = sphi 0, %s67
      %s71 = sphi 0, %s70
      %s87 = sphi 0, %s71
      %s93 = sphi 0, %s95
      %s96 = sphi 0, %s93
      %s97 = sphi 0, %s96
      %s113 = sphi 0, %s97
      %s117 = sphi 0, %s117
      %s119 = sphi 0, %s117
      %s120 = sphi 0, %s119
      %s134 = sphi 0, %s120
      %s142 = sphi 0, %s144
      %s145 = sphi 0, %s142
      %s146 = sphi 0, %s145
      %s162 = sphi 0, %s146
    $region4: #{tpu_custom_call.1} parent=1 // loop_header_branch
      %20 = sbr.rel (%p18) target = $region8
    $region5: #{tpu_custom_call.1} parent=1 // loop_body
      %s22 = ssub.s32 %s17, 1
      %s23 = ssub.s32 %s17, 2
      %s30 = sadd.s32 1, %s25
      %p31 = scmp.ge.s32.totalorder %s30, 1
      %s32 = scalar_select %p31, 0, %s30
      %s33 = sadd.s32 1, %s24
      %s34 = scalar_select %p31, %s33, %s24
      %p35 = scmp.ge.s32.totalorder %s34, 2
      %s36 = scalar_select %p35, 0, %s34
      %s37 = ssub.s32 %s24, %s36
      %s38 = ssub.s32 %s25, %s32
      %s39 = sor.u32 %s37, %s38
      %p40 = scmp.eq.s32.totalorder %s39, 0
      %s42 = sadd.s32 %s41, 1
      %s43 = scalar_select %p40, %s41, %s42
      %p46 = pneg %p40
      %p47 = scmp.eq.s32.totalorder %s17, 1
      %p48 = por %p46, %p47
      %p49 = scmp.ne.s32.totalorder %s41, %s44
      %p50 = scmp.eq.s32.totalorder %s17, 0
      %p51 = por %p49, %p50
      %p52 = scmp.ne.s32.totalorder %s41, %s44
      %p53 = scmp.eq.s32.totalorder %s22, 1
      %p54 = por %p52, %p53
      %p55 = scmp.ne.s32.totalorder %s44, %s45
      %p56 = scmp.eq.s32.totalorder %s22, 0
      %p57 = por %p55, %p56
      %p58 = scmp.ne.s32.totalorder %s44, %s45
      %p59 = scmp.eq.s32.totalorder %s23, 1
      %p60 = por %p58, %p59
      %p62 = scmp.ne.s32.totalorder %s45, %s61
      %p63 = scmp.eq.s32.totalorder %s23, 0
      %p64 = por %p62, %p63
      %s65 = ssub.s32 %s25, %s32
      %p66 = scmp.eq.s32.totalorder %s65, 0
      %s68 = sadd.s32 %s67, 1
      %s69 = scalar_select %p66, %s67, %s68
      %p72 = pneg %p66
      %p73 = scmp.eq.s32.totalorder %s17, 1
      %p74 = por %p72, %p73
      %p75 = scmp.ne.s32.totalorder %s67, %s70
      %p76 = scmp.eq.s32.totalorder %s17, 0
      %p77 = por %p75, %p76
      %p78 = scmp.ne.s32.totalorder %s67, %s70
      %p79 = scmp.eq.s32.totalorder %s22, 1
      %p80 = por %p78, %p79
      %p81 = scmp.ne.s32.totalorder %s70, %s71
      %p82 = scmp.eq.s32.totalorder %s22, 0
      %p83 = por %p81, %p82
      %p84 = scmp.ne.s32.totalorder %s70, %s71
      %p85 = scmp.eq.s32.totalorder %s23, 1
      %p86 = por %p84, %p85
      %p88 = scmp.ne.s32.totalorder %s71, %s87
      %p89 = scmp.eq.s32.totalorder %s23, 0
      %p90 = por %p88, %p89
      %s91 = ssub.s32 %s24, %s36
      %p92 = scmp.eq.s32.totalorder %s91, 0
      %s94 = sadd.s32 %s93, 1
      %s95 = scalar_select %p92, %s93, %s94
      %p98 = pneg %p92
      %p99 = scmp.eq.s32.totalorder %s17, 1
      %p100 = por %p98, %p99
      %p101 = scmp.ne.s32.totalorder %s93, %s96
      %p102 = scmp.eq.s32.totalorder %s17, 0
      %p103 = por %p101, %p102
      %p104 = scmp.ne.s32.totalorder %s93, %s96
      %p105 = scmp.eq.s32.totalorder %s22, 1
      %p106 = por %p104, %p105
      %p107 = scmp.ne.s32.totalorder %s96, %s97
      %p108 = scmp.eq.s32.totalorder %s22, 0
      %p109 = por %p107, %p108
      %p110 = scmp.ne.s32.totalorder %s96, %s97
      %p111 = scmp.eq.s32.totalorder %s23, 1
      %p112 = por %p110, %p111
      %p114 = scmp.ne.s32.totalorder %s97, %s113
      %p115 = scmp.eq.s32.totalorder %s23, 0
      %p116 = por %p114, %p115
      %s118 = sadd.s32 %s117, 1
      %p121 = scmp.eq.s32.totalorder %s17, 1
      %p122 = scmp.ne.s32.totalorder %s117, %s119
      %p123 = scmp.eq.s32.totalorder %s17, 0
      %p124 = por %p122, %p123
      %p125 = scmp.ne.s32.totalorder %s117, %s119
      %p126 = scmp.eq.s32.totalorder %s22, 1
      %p127 = por %p125, %p126
      %p128 = scmp.ne.s32.totalorder %s119, %s120
      %p129 = scmp.eq.s32.totalorder %s22, 0
      %p130 = por %p128, %p129
      %p131 = scmp.ne.s32.totalorder %s119, %s120
      %p132 = scmp.eq.s32.totalorder %s23, 1
      %p133 = por %p131, %p132
      %p135 = scmp.ne.s32.totalorder %s120, %s134
      %p136 = scmp.eq.s32.totalorder %s23, 0
      %p137 = por %p135, %p136
      %s138 = ssub.s32 %s24, %s36
      %s139 = ssub.s32 %s25, %s32
      %s140 = sor.u32 %s138, %s139
      %p141 = scmp.eq.s32.totalorder %s140, 0
      %s143 = sadd.s32 %s142, 1
      %s144 = scalar_select %p141, %s142, %s143
      %p147 = pneg %p141
      %p148 = scmp.eq.s32.totalorder %s17, 1
      %p149 = por %p147, %p148
      %p150 = scmp.ne.s32.totalorder %s142, %s145
      %p151 = scmp.eq.s32.totalorder %s17, 0
      %p152 = por %p150, %p151
      %p153 = scmp.ne.s32.totalorder %s142, %s145
      %p154 = scmp.eq.s32.totalorder %s22, 1
      %p155 = por %p153, %p154
      %p156 = scmp.ne.s32.totalorder %s145, %s146
      %p157 = scmp.eq.s32.totalorder %s22, 0
      %p158 = por %p156, %p157
      %p159 = scmp.ne.s32.totalorder %s145, %s146
      %p160 = scmp.eq.s32.totalorder %s23, 1
      %p161 = por %p159, %p160
      %p163 = scmp.ne.s32.totalorder %s146, %s162
      %p164 = scmp.eq.s32.totalorder %s23, 0
      %p165 = por %p163, %p164
      %p166 = scmp.le.s32.totalorder 1, %s17
      %p167 = scmp.lt.s32.totalorder %s17, 3
      %p168 = pnand %p166, %p167
      %p169 = pneg %p168
      // Predicated region
      $region9: #{tpu_custom_call.1} parent=5 // pred_check
        _
      $region10: #{tpu_custom_call.1} parent=5 // pred_check_branch
        %171 = sbr.rel (%p168) target = $region12
      $region11: #{tpu_custom_call.1} parent=5 // pred_region
        %s172 = ssub.s32 %s17, 1
        // Predicated region
        $region13: #{tpu_custom_call.1} parent=11 // pred_check
          %p173 = pneg %p83
        $region14: #{tpu_custom_call.1} parent=11 // pred_check_branch
          %175 = sbr.rel (%p173) target = $region16
        $region15: #{tpu_custom_call.1} parent=11 // pred_region
          %s176 = smul.u32 2, %s27
          %178 = vsyncadd [#allocation4], 0
          %s179 = smul.addr %s176, 4
          %s180 = scalar_lea.hbm %s1, %s179
          %s181 = sshll.u32 %s180, 4
          %s182 = int_to_ptr.hbm [resolvable:$true] %s181
          %s183 = sshll.u32 [#allocation3], 4
          %s184 = int_to_ptr.vmem [resolvable:$true] %s183
          %189 = dma.hbm_to_vmem [thread:$0]  %s182, 896, %s184, [#allocation4], 128, 128, 8
        $region16: #{tpu_custom_call.1} parent=11 // pred_fallthru
          _
        // Predicated region
        $region17: #{tpu_custom_call.1} parent=11 // pred_check
          %p190 = pneg %p130
        $region18: #{tpu_custom_call.1} parent=11 // pred_check_branch
          %192 = sbr.rel (%p190) target = $region20
        $region19: #{tpu_custom_call.1} parent=11 // pred_region
          _
        $region20: #{tpu_custom_call.1} parent=11 // pred_fallthru
          _
      $region12: #{tpu_custom_call.1} parent=5 // pred_fallthru
        _
      %p193 = scmp.lt.s32.totalorder %s17, 2
      // Predicated region
      $region21: #{tpu_custom_call.1} parent=5 // pred_check
        %p194 = pneg %p193
      $region22: #{tpu_custom_call.1} parent=5 // pred_check_branch
        %196 = sbr.rel (%p194) target = $region24
      $region23: #{tpu_custom_call.1} parent=5 // pred_region
        // Predicated region
        $region25: #{tpu_custom_call.1} parent=23 // pred_check
          %p197 = pneg %p51
        $region26: #{tpu_custom_call.1} parent=23 // pred_check_branch
          %199 = sbr.rel (%p197) target = $region28
        $region27: #{tpu_custom_call.1} parent=23 // pred_region
          %s200 = smul.u32 2, %s25
          %p201 = scmp.lt.s32.totalorder %s24, 1
          %s202 = scalar_select %p201, %s24, 1
          %p203 = scmp.lt.s32.totalorder %s200, 1
          %s204 = scalar_select %p203, %s200, 1
          %s205 = smul.addr %s202, 2
          %s206 = sadd.s32 %s204, %s205
          %s207 = smul.addr %s206, 2
          %s208 = scalar_lea.vmem %s0, %s207
          %s209 = smul.u32 2, %s25
        $region28: #{tpu_custom_call.1} parent=23 // pred_fallthru
          _
        // Predicated region
        $region29: #{tpu_custom_call.1} parent=23 // pred_check
          %p210 = pneg %p103
        $region30: #{tpu_custom_call.1} parent=23 // pred_check_branch
          %212 = sbr.rel (%p210) target = $region32
        $region31: #{tpu_custom_call.1} parent=23 // pred_region
          %s213 = sand.u32 %s93, 1
          %s214 = scalar_lea.sflag [#allocation7], %s213
          %s215 = sand.u32 %s93, 1
          %s216 = smul.addr %s215, 16
          %s217 = scalar_lea.vmem [#allocation6], %s216
          %219 = vsyncadd %s214, 0
          %s220 = smul.addr %s24, 4
          %s221 = smul.addr %s220, 4
          %s222 = scalar_lea.hbm %s2, %s221
          %s223 = sshll.u32 %s222, 4
          %s224 = int_to_ptr.hbm [resolvable:$true] %s223
          %s225 = sshll.u32 %s217, 4
          %s226 = int_to_ptr.vmem [resolvable:$true] %s225
          %231 = dma.hbm_to_vmem [thread:$0]  %s224, 256, %s226, %s214, 64, 64, 4
        $region32: #{tpu_custom_call.1} parent=23 // pred_fallthru
          _
      $region24: #{tpu_custom_call.1} parent=5 // pred_fallthru
        _
      %p232 = scmp.le.s32.totalorder 1, %s17
      %p233 = scmp.lt.s32.totalorder %s17, 3
      %p234 = pnand %p232, %p233
      %p235 = pneg %p234
      // Predicated region
      $region33: #{tpu_custom_call.1} parent=5 // pred_check
        _
      $region34: #{tpu_custom_call.1} parent=5 // pred_check_branch
        %237 = sbr.rel (%p234) target = $region36
      $region35: #{tpu_custom_call.1} parent=5 // pred_region
        %s238 = ssub.s32 %s17, 1
        // Predicated region
        $region37: #{tpu_custom_call.1} parent=35 // pred_check
          %p239 = pneg %p83
        $region38: #{tpu_custom_call.1} parent=35 // pred_check_branch
          %241 = sbr.rel (%p239) target = $region40
        $region39: #{tpu_custom_call.1} parent=35 // pred_region
          %243 = dma.done [#allocation4], 896
        $region40: #{tpu_custom_call.1} parent=35 // pred_fallthru
          _
        %s244 = sand.u32 %s96, 1
        %s245 = scalar_lea.sflag [#allocation7], %s244
        %s246 = sand.u32 %s96, 1
        %s247 = smul.addr %s246, 16
        %s248 = scalar_lea.vmem [#allocation6], %s247
        // Predicated region
        $region41: #{tpu_custom_call.1} parent=35 // pred_check
          %p249 = pneg %p109
        $region42: #{tpu_custom_call.1} parent=35 // pred_check_branch
          %251 = sbr.rel (%p249) target = $region44
        $region43: #{tpu_custom_call.1} parent=35 // pred_region
          %253 = dma.done %s245, 256
        $region44: #{tpu_custom_call.1} parent=35 // pred_fallthru
          _
        %s254 = smul.u32 2, %s27
        %p255 = scmp.lt.s32.totalorder %s26, 1
        %s256 = scalar_select %p255, %s26, 1
        %p257 = scmp.lt.s32.totalorder %s254, 1
        %s258 = scalar_select %p257, %s254, 1
        %s259 = smul.addr %s256, 2
        %s260 = sadd.s32 %s258, %s259
        %s261 = smul.addr %s260, 2
        %s262 = scalar_lea.vmem %s0, %s261
        %p263 = pneg %p57
        %p264 = pneg %p54
        %p265 = pneg %p83
        %p266 = pneg %p80
        %s267 = sand.u32 %s96, 1
        %s268 = scalar_lea.sflag [#allocation7], %s267
        %s269 = sand.u32 %s96, 1
        %s270 = smul.addr %s269, 16
        %s271 = scalar_lea.vmem [#allocation6], %s270
        %p272 = pneg %p109
        %p273 = pneg %p106
        %p274 = pneg %p130
        %p275 = pneg %p127
        %p276 = pneg %p158
        %p277 = pneg %p155
        %s278 = sand.u32 %s145, 1
        %s279 = scalar_lea.sflag [#allocation5], %s278
        %s280 = sand.u32 %s145, 1
        %s281 = smul.addr %s280, 64
        %s282 = scalar_lea.vmem [#allocation8], %s281
        %s283 = smul.u32 2, %s27
        %p284 = scmp.lt.s32.totalorder %s26, 1
        %s285 = scalar_select %p284, %s26, 1
        %p286 = scmp.lt.s32.totalorder %s283, 1
        %s287 = scalar_select %p286, %s283, 1
        %s288 = smul.addr %s285, 2
        %s289 = sadd.s32 %s287, %s288
        %s290 = smul.addr %s289, 2
        %s291 = scalar_lea.vmem %s0, %s290
        %s292 = smul.u32 2, %s27
        %s293 = smul.u32 2, %s27
        %s294 = smul.u32 2, %s27
        %v296 = vld [vmem:[%s3] sm:$0xf]
        %v297 = vld [vmem:[%s3 + $0x4] sm:$0xf]
        %v298 = vld [vmem:[%s3 + $0x8] sm:$0xf]
        %v299 = vld [vmem:[%s3 + $0xc] sm:$0xf]
        %v300 = vld [vmem:[%s291] sm:$0xf]
        %v305 = vunpack.c.l.b16 %v296
        %v306 = vunpack.c.l.b16 %v297
        %v307 = vunpack.c.l.b16 %v298
        %v308 = vunpack.c.l.b16 %v299
        %v309 = vpack.c.b16 %v306, %v305
        %v310 = vpack.c.b16 %v308, %v307
        %312 = vst [vmem:[#allocation1] ss:$4 sm:$0xff] %v300
        %v313 = vld.sshfl [vmem:[#allocation1] sm:$0xff pattern:$0x73625140]
        %v314 = vld.sshfl [vmem:[#allocation1 + $0x8] sm:$0xff pattern:$0x73625140]
        %vm315 = vcmask 31744
        %v317 = vsel %vm315, %v309, 0
        %v320 = vsel %vm315, %v310, 0
        %vm322 = vcmask 1041408
        %v323 = vsel %vm322, %v313, 0
        %v325 = vsel %vm322, %v314, 0
        %327 = vmatpush.bf16.msra.mxu0 0
        %328 = vmatpush.bf16.msra.mxu0 0
        %329 = vmatpush.bf16.msra.mxu0 0
        %330 = vmatpush.bf16.msra.mxu0 0
        %331 = vmatpush.bf16.msra.mxu0 0
        %332 = vmatpush.bf16.msra.mxu0 0
        %333 = vmatpush.bf16.msra.mxu0 0
        %334 = vmatpush.bf16.msra.mxu0 %v323
        %335 = vmatmul.bf16.gmra.mxu0 %v317
        %v336 = vpop.f32.mrf.mxu0
        %v337 = vadd.f32 0.0, %v336
        %v338 = vpop.f32.mrf.mxu0
        %v339 = vadd.f32 0.0, %v338
        %340 = vmatmul.bf16.gmra.mxu0 %v320
        %v341 = vpop.f32.mrf.mxu0
        %v342 = vadd.f32 0.0, %v341
        %v343 = vpop.f32.mrf.mxu0
        %v344 = vadd.f32 0.0, %v343
        %345 = vdwg.mxu0
        %346 = vmatpush.bf16.msra.mxu0 0
        %347 = vmatpush.bf16.msra.mxu0 0
        %348 = vmatpush.bf16.msra.mxu0 0
        %349 = vmatpush.bf16.msra.mxu0 0
        %350 = vmatpush.bf16.msra.mxu0 0
        %351 = vmatpush.bf16.msra.mxu0 0
        %352 = vmatpush.bf16.msra.mxu0 0
        %353 = vmatpush.bf16.msra.mxu0 %v325
        %354 = vmatmul.bf16.gmra.mxu0 %v317
        %v355 = vpop.f32.mrf.mxu0
        %v356 = vadd.f32 0.0, %v355
        %v357 = vpop.f32.mrf.mxu0
        %v358 = vadd.f32 0.0, %v357
        %359 = vmatmul.bf16.gmra.mxu0 %v320
        %v360 = vpop.f32.mrf.mxu0
        %v361 = vadd.f32 0.0, %v360
        %v362 = vpop.f32.mrf.mxu0
        %v363 = vadd.f32 0.0, %v362
        %364 = vdwg.mxu0
        %365 = vst [vmem:[#allocation2] sm:$0xff] %v337
        %366 = vst [vmem:[#allocation2 + $0x8] sm:$0xff] %v356
        %367 = vst [vmem:[#allocation2 + $0x10] sm:$0xff] %v339
        %368 = vst [vmem:[#allocation2 + $0x18] sm:$0xff] %v358
        %369 = vst [vmem:[#allocation2 + $0x20] sm:$0xff] %v342
        %370 = vst [vmem:[#allocation2 + $0x28] sm:$0xff] %v361
        %371 = vst [vmem:[#allocation2 + $0x30] sm:$0xff] %v344
        %372 = vst [vmem:[#allocation2 + $0x38] sm:$0xff] %v363
        %v373 = vld [vmem:[#allocation2] sm:$0xff]
        %v374 = vld [vmem:[#allocation2 + $0x8] sm:$0xff]
        %v375 = vld [vmem:[#allocation2 + $0x10] sm:$0xff]
        %v376 = vld [vmem:[#allocation2 + $0x18] sm:$0xff]
        %v377 = vld [vmem:[#allocation2 + $0x20] sm:$0xff]
        %v378 = vld [vmem:[#allocation2 + $0x28] sm:$0xff]
        %v379 = vld [vmem:[#allocation2 + $0x30] sm:$0xff]
        %v380 = vld [vmem:[#allocation2 + $0x38] sm:$0xff]
        %v381 = vld [vmem:[%s248] sm:$0xf]
        %v382 = vld [vmem:[%s248 + $0x4] sm:$0xf]
        %v383 = vld [vmem:[%s248 + $0x8] sm:$0xf]
        %v384 = vld [vmem:[%s248 + $0xc] sm:$0xf]
        %v385 = vld [vmem:[#allocation3] sm:$0xff]
        %v386 = vld [vmem:[#allocation3 + $0x8] sm:$0xff]
        %v387 = vld [vmem:[#allocation3 + $0x10] sm:$0xff]
        %v388 = vld [vmem:[#allocation3 + $0x18] sm:$0xff]
        %v389 = vld [vmem:[#allocation3 + $0x20] sm:$0xff]
        %v390 = vld [vmem:[#allocation3 + $0x28] sm:$0xff]
        %v391 = vld [vmem:[#allocation3 + $0x30] sm:$0x33]
        %v396 = vunpack.c.l.b16 %v381
        %v397 = vunpack.c.l.b16 %v382
        %v398 = vunpack.c.l.b16 %v383
        %v399 = vunpack.c.l.b16 %v384
        %v400 = vpack.c.b16 %v397, %v396
        %v401 = vpack.c.b16 %v399, %v398
        %v409 = vunpack.c.l.b16 %v385
        %v410 = vunpack.c.h.b16 %v385
        %v411 = vunpack.c.l.b16 %v386
        %v412 = vunpack.c.h.b16 %v386
        %v413 = vunpack.c.l.b16 %v387
        %v414 = vunpack.c.h.b16 %v387
        %v415 = vunpack.c.l.b16 %v388
        %v416 = vunpack.c.h.b16 %v388
        %v417 = vunpack.c.l.b16 %v389
        %v418 = vunpack.c.h.b16 %v389
        %v419 = vunpack.c.l.b16 %v390
        %v420 = vunpack.c.h.b16 %v390
        %v421 = vunpack.c.l.b16 %v391
        %v422 = vunpack.c.h.b16 %v391
        %v423 = vpack.c.b16 %v411, %v409
        %v424 = vpack.c.b16 %v412, %v410
        %v425 = vpack.c.b16 %v415, %v413
        %v426 = vpack.c.b16 %v416, %v414
        %v427 = vpack.c.b16 %v419, %v417
        %v428 = vpack.c.b16 %v420, %v418
        %v429 = vpack.c.b16 %v421, %v421
        %v430 = vpack.c.b16 %v422, %v422
        %vm437 = vcmask 416768
        %v439 = vsel %vm437, %v400, 0
        %v442 = vsel %vm437, %v401, 0
        %vm444 = vcmask 1040384
        %v445 = vsel %vm444, 4294967295, 65535
        %v446 = vsel %vm322, %v445, 0
        %v448 = vand.u32 %v429, %v446
        %v451 = vand.u32 %v430, %v446
        %453 = vmatpush.bf16.msra.mxu0 0
        %454 = vmatpush.bf16.msra.mxu0 0
        %455 = vmatpush.bf16.msra.mxu0 0
        %456 = vmatpush.bf16.msra.mxu0 0
        %457 = vmatpush.bf16.msra.mxu0 %v448
        %458 = vmatpush.bf16.msra.mxu0 %v427
        %459 = vmatpush.bf16.msra.mxu0 %v425
        %460 = vmatpush.bf16.msra.mxu0 %v423
        %461 = vmatmul.bf16.gmra.mxu0 %v439
        %v462 = vpop.f32.mrf.mxu0
        %v463 = vadd.f32 0.0, %v462
        %v464 = vpop.f32.mrf.mxu0
        %v465 = vadd.f32 0.0, %v464
        %466 = vmatmul.bf16.gmra.mxu0 %v442
        %v467 = vpop.f32.mrf.mxu0
        %v468 = vadd.f32 0.0, %v467
        %v469 = vpop.f32.mrf.mxu0
        %v470 = vadd.f32 0.0, %v469
        %471 = vdwg.mxu0
        %472 = vmatpush.bf16.msra.mxu0 0
        %473 = vmatpush.bf16.msra.mxu0 0
        %474 = vmatpush.bf16.msra.mxu0 0
        %475 = vmatpush.bf16.msra.mxu0 0
        %476 = vmatpush.bf16.msra.mxu0 %v451
        %477 = vmatpush.bf16.msra.mxu0 %v428
        %478 = vmatpush.bf16.msra.mxu0 %v426
        %479 = vmatpush.bf16.msra.mxu0 %v424
        %480 = vmatmul.bf16.gmra.mxu0 %v439
        %v481 = vpop.f32.mrf.mxu0
        %v482 = vadd.f32 0.0, %v481
        %v483 = vpop.f32.mrf.mxu0
        %v484 = vadd.f32 0.0, %v483
        %485 = vmatmul.bf16.gmra.mxu0 %v442
        %v486 = vpop.f32.mrf.mxu0
        %v487 = vadd.f32 0.0, %v486
        %v488 = vpop.f32.mrf.mxu0
        %v489 = vadd.f32 0.0, %v488
        %490 = vdwg.mxu0
        %v491 = vadd.f32 %v373, %v463
        %v492 = vadd.f32 %v374, %v482
        %v493 = vadd.f32 %v375, %v465
        %v494 = vadd.f32 %v376, %v484
        %v495 = vadd.f32 %v377, %v468
        %v496 = vadd.f32 %v378, %v487
        %v497 = vadd.f32 %v379, %v470
        %v498 = vadd.f32 %v380, %v489
        %499 = vst [vmem:[#allocation2] sm:$0xff] %v491
        %500 = vst [vmem:[#allocation2 + $0x8] sm:$0xff] %v492
        %501 = vst [vmem:[#allocation2 + $0x10] sm:$0xff] %v493
        %502 = vst [vmem:[#allocation2 + $0x18] sm:$0xff] %v494
        %503 = vst [vmem:[#allocation2 + $0x20] sm:$0xff] %v495
        %504 = vst [vmem:[#allocation2 + $0x28] sm:$0xff] %v496
        %505 = vst [vmem:[#allocation2 + $0x30] sm:$0xff] %v497
        %506 = vst [vmem:[#allocation2 + $0x38] sm:$0xff] %v498
        %v507 = vld [vmem:[#allocation2] sm:$0xff]
        %v508 = vld [vmem:[#allocation2 + $0x8] sm:$0xff]
        %v509 = vld [vmem:[#allocation2 + $0x10] sm:$0xff]
        %v510 = vld [vmem:[#allocation2 + $0x18] sm:$0xff]
        %v511 = vld [vmem:[#allocation2 + $0x20] sm:$0xff]
        %v512 = vld [vmem:[#allocation2 + $0x28] sm:$0xff]
        %v513 = vld [vmem:[#allocation2 + $0x30] sm:$0xff]
        %v514 = vld [vmem:[#allocation2 + $0x38] sm:$0xff]
        %v515 = vmax.f32 %v507, 0.0
        %v516 = vmax.f32 %v508, 0.0
        %v517 = vmax.f32 %v509, 0.0
        %v518 = vmax.f32 %v510, 0.0
        %v519 = vmax.f32 %v511, 0.0
        %v520 = vmax.f32 %v512, 0.0
        %v521 = vmax.f32 %v513, 0.0
        %v522 = vmax.f32 %v514, 0.0
        %523 = vst [vmem:[%s282] sm:$0xff] %v515
        %524 = vst [vmem:[%s282 + $0x8] sm:$0xff] %v516
        %525 = vst [vmem:[%s282 + $0x10] sm:$0xff] %v517
        %526 = vst [vmem:[%s282 + $0x18] sm:$0xff] %v518
        %527 = vst [vmem:[%s282 + $0x20] sm:$0xff] %v519
        %528 = vst [vmem:[%s282 + $0x28] sm:$0xff] %v520
        %529 = vst [vmem:[%s282 + $0x30] sm:$0xff] %v521
        %530 = vst [vmem:[%s282 + $0x38] sm:$0xff] %v522
        %s531 = sand.u32 %s145, 1
        %s532 = scalar_lea.sflag [#allocation5], %s531
        %s533 = sand.u32 %s145, 1
        %s534 = smul.addr %s533, 64
        %s535 = scalar_lea.vmem [#allocation8], %s534
        // Predicated region
        $region45: #{tpu_custom_call.1} parent=35 // pred_check
          %p536 = pneg %p155
        $region46: #{tpu_custom_call.1} parent=35 // pred_check_branch
          %538 = sbr.rel (%p536) target = $region48
        $region47: #{tpu_custom_call.1} parent=35 // pred_region
          %s539 = smul.u32 2, %s27
          %541 = vsyncadd %s532, 0
          %s542 = smul.addr %s26, 8
          %s543 = sadd.s32 %s539, %s542
          %s544 = smul.addr %s543, 8
          %s545 = scalar_lea.hbm %s4, %s544
          %s546 = sshll.u32 %s535, 4
          %s547 = int_to_ptr.vmem [resolvable:$true] %s546
          %s548 = sshll.u32 %s545, 4
          %s549 = int_to_ptr.hbm [resolvable:$true] %s548
          %554 = dma.vmem_to_hbm [thread:$0]  %s547, 1024, %s549, %s532, 256, 256, 16
        $region48: #{tpu_custom_call.1} parent=35 // pred_fallthru
          _
      $region36: #{tpu_custom_call.1} parent=5 // pred_fallthru
        _
      %p555 = scmp.le.s32.totalorder 2, %s17
      // Predicated region
      $region49: #{tpu_custom_call.1} parent=5 // pred_check
        %p556 = pneg %p555
      $region50: #{tpu_custom_call.1} parent=5 // pred_check_branch
        %558 = sbr.rel (%p556) target = $region52
      $region51: #{tpu_custom_call.1} parent=5 // pred_region
        %s559 = ssub.s32 %s17, 2
        // Predicated region
        $region53: #{tpu_custom_call.1} parent=51 // pred_check
          %p560 = pneg %p161
        $region54: #{tpu_custom_call.1} parent=51 // pred_check_branch
          %562 = sbr.rel (%p560) target = $region56
        $region55: #{tpu_custom_call.1} parent=51 // pred_region
          %s563 = sand.u32 %s146, 1
          %s564 = scalar_lea.sflag [#allocation5], %s563
          %s565 = sand.u32 %s146, 1
          %s566 = smul.addr %s565, 64
          %s567 = scalar_lea.vmem [#allocation8], %s566
          %569 = dma.done %s564, 1024
        $region56: #{tpu_custom_call.1} parent=51 // pred_fallthru
          _
      $region52: #{tpu_custom_call.1} parent=5 // pred_fallthru
        _
    $region6: #{tpu_custom_call.1} parent=1 // loop_footer
      %s21 = sadd.s32 1, %s17
    $region7: #{tpu_custom_call.1} parent=1 // loop_footer_branch
      %16 = sbr.rel target = $region3
    $region8: #{tpu_custom_call.1} parent=1 // loop_exit
      _
    %570 = vsyncpa [#allocation4], 1
    %s571 = scalar_lea.sflag [#allocation4], 1
    %572 = vsyncpa %s571, 1
    %573 = vsyncpa [#allocation7], 1
    %s574 = scalar_lea.sflag [#allocation7], 1
    %575 = vsyncpa %s574, 1
    %576 = vsyncpa [#allocation5], 1
    %s577 = scalar_lea.sflag [#allocation5], 1
    %578 = vsyncpa %s577, 1

</llo_original>
